<compile_context>
chip_gen: v6e
topology: v6e:2x2x1
jax: 0.10.0
libtpu: 0.0.40
codegen_flags: <defaults>
</compile_context>

<pallas_src>
import jax
import jax.numpy as jnp
from jax.experimental import pallas as pl
from jax.experimental.pallas import tpu as pltpu

_MIB = 1 << 20


def _channel_attention_kernel(x_ref, w1_ref, w2_ref, o_ref):
    # x_ref : (TR, L)   packed voxel-feature tile (L = pack*C lanes)
    # w1_ref: (L, Hr)   block-diagonal fc1^T      (Hr = pack*Cr)
    # w2_ref: (Hr, L)   block-diagonal (2*fc2)^T  (factor 2 folds avg+max)
    #
    # NOTE: the ragged last grid block may contain rows past N; they hold garbage
    # (possibly Inf/NaN through exp) but are never written back.  All math in this
    # kernel must therefore stay strictly row-wise.
    x = x_ref[...]

    # fc1 + ReLU (shared by avg- and max-pool branches; 1x1x1 pools are identity)
    h = jnp.maximum(
        jnp.dot(x, w1_ref[...], preferred_element_type=jnp.float32), 0.0)

    # fc2 with the 2x already folded into the weights -> y2 == avg_out + max_out
    y2 = jnp.dot(h, w2_ref[...], preferred_element_type=jnp.float32)

    # sigmoid gate applied to the original input features (elementwise, f32)
    gate = 1.0 / (1.0 + jnp.exp(-y2))
    o_ref[...] = (gate * x.astype(jnp.float32)).astype(o_ref.dtype)


def _block_diag(mat, n):
    """block_diag(mat, mat, ..., mat) with n copies (done once, tiny)."""
    if n == 1:
        return mat
    r, c = mat.shape
    out = jnp.zeros((n * r, n * c), mat.dtype)
    for i in range(n):
        out = out.at[i * r:(i + 1) * r, i * c:(i + 1) * c].set(mat)
    return out


def _default_tile_bytes():
    """Per-buffer tile byte budget for the HBM-bound row-streaming loop.

    2 MiB/tile => ~3 us/step at v6e's 1.4 TB/s (per-step overhead < ~12%);
    v7x's 3.2 TB/s HBM wants ~2x that to keep overhead down.  In+out, double
    buffered, is 4x this number -- far under every generation's physical VMEM.
    """
    try:
        # v7x reports 64 MiB VMEM per TensorCore (v5e/v6e report 128 MiB) and has
        # the highest HBM bandwidth -> use bigger tiles there.
        if pltpu.get_tpu_info().vmem_capacity_bytes <= 64 * _MIB:
            return 4 * _MIB
    except Exception:
        pass  # query unavailable (e.g. interpret mode): conservative default
    return 2 * _MIB


def sparse_channel_attention(features, w_fc1, w_fc2, *, tile_bytes=None):
    """features: [N, C] active-voxel features; w_fc1: [Cr, C]; w_fc2: [C, Cr]
    (PyTorch SubMConv3d(k=1) convention [out_ch, in_ch]).  Returns the gated
    feature matrix; the sparse voxel indices are untouched by the module.
    Works for f32 or bf16 features (bf16 halves HBM traffic; gate math stays f32).
    """
    N, C = features.shape
    Cr = w_fc1.shape[0]
    assert w_fc1.shape == (Cr, C) and w_fc2.shape == (C, Cr)

    dt = features.dtype
    itemsize = jnp.dtype(dt).itemsize

    # Lane-dense packing: fold `pack` consecutive voxels into one 128-lane row
    # (a free reshape of contiguous HBM) so loads / gate-mul / stores are full
    # unmasked vregs and the MXU contraction runs at K = pack*C.
    pack = 128 // C if (C < 128 and 128 % C == 0) else 1
    if pack > 1 and N % pack:
        # TODO(synk): guarantee N % pack == 0 upstream in the voxel pipeline so the
        # packed layout always applies; the unpacked fallback below keeps zero extra
        # HBM passes (no jnp.pad / out[:N] round trips) at the cost of C-lane tiles.
        pack = 1

    lanes = pack * C
    hidden = pack * Cr
    n_rows = N // pack
    x2d = features.reshape(n_rows, lanes)  # free reshape of contiguous HBM

    # Weight prep (once, at trace time): right-multiply form, fold the avg+max
    # "2x" into fc2 (exact: power-of-two scale), block-diagonalize for packing.
    w1_bd = _block_diag(jnp.transpose(w_fc1).astype(dt), pack)          # [lanes, hidden]
    w2_bd = _block_diag((2.0 * jnp.transpose(w_fc2)).astype(dt), pack)  # [hidden, lanes]

    # ---- Tile / grid selection ---------------------------------------------
    if tile_bytes is None:
        tile_bytes = _default_tile_bytes()
    tile_rows = max(16, (tile_bytes // (lanes * itemsize) // 16) * 16)

    # Keep at least 4 grid steps for anything non-trivial so both v7x TensorCores
    # get work via the "parallel" row axis (v5e/v6e: 1 TC, extra steps are noise).
    # If xprof shows v7x not sharding, switch to pltpu.CORE_PARALLEL here.
    MIN_BLOCKS = 4
    if n_rows >= 16 * MIN_BLOCKS:
        tile_rows = min(tile_rows, pl.cdiv(n_rows, MIN_BLOCKS))
        tile_rows = max(16, (tile_rows // 16) * 16)
    else:
        tile_rows = n_rows  # tiny input: one full-extent block (always legal)
    grid = (pl.cdiv(n_rows, tile_rows),)

    # VMEM budget: in+out tiles double-buffered + resident weights + slack.
    tile_b = tile_rows * lanes * itemsize
    w_b = (w1_bd.size + w2_bd.size) * itemsize
    vmem_limit = int(max(32 * _MIB, 4 * tile_b + 2 * w_b + 2 * _MIB))

    # Advisory cost: tells XLA this custom call is bandwidth-heavy so surrounding
    # sparse-backbone ops can be scheduled around it instead of serialized.
    cost = pl.CostEstimate(
        flops=int(n_rows * (4 * lanes * hidden + 4 * lanes)),
        transcendentals=int(n_rows * lanes),
        bytes_accessed=int(2 * n_rows * lanes * itemsize + w_b),
    )

    out = pl.pallas_call(
        _channel_attention_kernel,
        out_shape=jax.ShapeDtypeStruct((n_rows, lanes), dt),
        grid_spec=pltpu.PrefetchScalarGridSpec(
            num_scalar_prefetch=0,
            grid=grid,
            in_specs=[
                # features tile (ragged last block handled by Pallas; no pad/slice)
                pl.BlockSpec((tile_rows, lanes), lambda i: (i, 0)),
                pl.BlockSpec((lanes, hidden), lambda i: (0, 0)),  # fc1^T (resident)
                pl.BlockSpec((hidden, lanes), lambda i: (0, 0)),  # 2*fc2^T (resident)
            ],
            out_specs=pl.BlockSpec((tile_rows, lanes), lambda i: (i, 0)),
        ),
        compiler_params=pltpu.CompilerParams(
            dimension_semantics=("parallel",),   # row axis shards across v7x TCs
            vmem_limit_bytes=vmem_limit,
        ),
        cost_estimate=cost,
    )(x2d, w1_bd, w2_bd)

    return out.reshape(N, C)


def reference(features, w_fc1, w_fc2):
    xf = features.astype(jnp.float32)
    h = jnp.maximum(xf @ w_fc1.T.astype(jnp.float32), 0.0)
    y = h @ w_fc2.T.astype(jnp.float32)
    return (jax.nn.sigmoid(y + y) * xf).astype(features.dtype)


if __name__ == "__main__":
    # Shapes consistent with the module: in_planes=64, ratio=16.
    in_planes, ratio = 64, 16
    cr = in_planes // ratio

    key = jax.random.PRNGKey(0)
    k_x1, k_x2, k_w1, k_w2 = jax.random.split(key, 4)

    # SubMConv3d(k=1) weights, PyTorch convention [out_ch, in_ch]:
    w_fc1 = jax.random.normal(k_w1, (cr, in_planes), dtype=jnp.float32) * 0.1
    w_fc2 = jax.random.normal(k_w2, (in_planes, cr), dtype=jnp.float32) * 0.1

    # N=200 active voxels: lane-packed path (pack=2 -> 128-lane rows).
    feats = jax.random.normal(k_x1, (200, in_planes), dtype=jnp.float32)
    out = jax.block_until_ready(sparse_channel_attention(feats, w_fc1, w_fc2))
    assert out.shape == feats.shape
    assert jnp.allclose(out, reference(feats, w_fc1, w_fc2), atol=1e-5, rtol=1e-5)

    # N=201 (odd): exercises the unpacked fallback (no pad / no out[:N] copies).
    feats2 = jax.random.normal(k_x2, (201, in_planes), dtype=jnp.float32)
    out2 = jax.block_until_ready(sparse_channel_attention(feats2, w_fc1, w_fc2))
    assert out2.shape == feats2.shape
    assert jnp.allclose(out2, reference(feats2, w_fc1, w_fc2), atol=1e-5, rtol=1e-5)

    print("KERNEL_OK")
</pallas_src>

<mosaic_0001>
module attributes {stable_mosaic.version = 11 : i64} {
  func.func @_channel_attention_kernel(%arg0: i32, %arg1: memref<16x128xf32, #tpu.memory_space<vmem>>, %arg2: memref<128x8xf32, #tpu.memory_space<vmem>>, %arg3: memref<8x128xf32, #tpu.memory_space<vmem>>, %arg4: memref<16x128xf32, #tpu.memory_space<vmem>>) attributes {dimension_semantics = [#tpu.dimension_semantics<parallel>], iteration_bounds = array<i64: 7>, scalar_prefetch = 0 : i64, scratch_operands = 0 : i64, tpu.core_type = #tpu.core_type<tc>, window_params = [{transform_indices = @transform_0, window_bounds = array<i64: 16, 128>}, {pipeline_mode = #tpu.pipeline_mode<synchronous>, transform_indices = @transform_1, window_bounds = array<i64: 128, 8>}, {pipeline_mode = #tpu.pipeline_mode<synchronous>, transform_indices = @transform_2, window_bounds = array<i64: 8, 128>}, {transform_indices = @transform_3, window_bounds = array<i64: 16, 128>}]} {
    %c0 = arith.constant 0 : index
    %c0_0 = arith.constant 0 : index
    %0 = vector.load %arg1[%c0, %c0_0] : memref<16x128xf32, #tpu.memory_space<vmem>>, vector<16x128xf32>
    %c0_1 = arith.constant 0 : index
    %c0_2 = arith.constant 0 : index
    %1 = vector.load %arg2[%c0_1, %c0_2] : memref<128x8xf32, #tpu.memory_space<vmem>>, vector<128x8xf32>
    %cst = arith.constant dense<0.000000e+00> : vector<16x8xf32>
    %2 = tpu.matmul %0, %1, %cst {dimension_numbers = #tpu.dot_dimension_numbers<[1], [0], [0], [1], [0, 0, 1, 1], [], []>} : vector<16x128xf32>, vector<128x8xf32>, vector<16x8xf32> -> vector<16x8xf32>
    %cst_3 = arith.constant 0.000000e+00 : f32
    %3 = vector.broadcast %cst_3 : f32 to vector<16x8xf32>
    %4 = arith.maximumf %2, %3 : vector<16x8xf32>
    %c0_4 = arith.constant 0 : index
    %c0_5 = arith.constant 0 : index
    %5 = vector.load %arg3[%c0_4, %c0_5] : memref<8x128xf32, #tpu.memory_space<vmem>>, vector<8x128xf32>
    %cst_6 = arith.constant dense<0.000000e+00> : vector<16x128xf32>
    %6 = tpu.matmul %4, %5, %cst_6 {dimension_numbers = #tpu.dot_dimension_numbers<[1], [0], [0], [1], [0, 0, 1, 1], [], []>} : vector<16x8xf32>, vector<8x128xf32>, vector<16x128xf32> -> vector<16x128xf32>
    %cst_7 = arith.constant 0.000000e+00 : f32
    %7 = vector.broadcast %cst_7 : f32 to vector<16x128xf32>
    %8 = arith.subf %7, %6 : vector<16x128xf32>
    %9 = math.exp %8 : vector<16x128xf32>
    %cst_8 = arith.constant 1.000000e+00 : f32
    %10 = vector.broadcast %cst_8 : f32 to vector<16x128xf32>
    %11 = arith.addf %10, %9 : vector<16x128xf32>
    %cst_9 = arith.constant 1.000000e+00 : f32
    %12 = vector.broadcast %cst_9 : f32 to vector<16x128xf32>
    %13 = arith.divf %12, %11 : vector<16x128xf32>
    %14 = arith.mulf %13, %0 : vector<16x128xf32>
    %c0_10 = arith.constant 0 : index
    %c0_11 = arith.constant 0 : index
    %15 = vector.load %arg4[%c0_10, %c0_11] : memref<16x128xf32, #tpu.memory_space<vmem>>, vector<16x128xf32>
    tpu.vector_store %arg4[%c0_10, %c0_11], %14 {strides = array<i32>} : memref<16x128xf32, #tpu.memory_space<vmem>>, vector<16x128xf32>,
    return
  }
  func.func @transform_0(%arg0: i32) -> (i32, i32) {
    %c0_i32 = arith.constant 0 : i32
    %c0_i32_0 = arith.constant 0 : i32
    return %arg0, %c0_i32 : i32, i32
  }
  func.func @transform_1(%arg0: i32) -> (i32, i32) {
    %c0_i32 = arith.constant 0 : i32
    %c0_i32_0 = arith.constant 0 : i32
    %c0_i32_1 = arith.constant 0 : i32
    return %c0_i32, %c0_i32_0 : i32, i32
  }
  func.func @transform_2(%arg0: i32) -> (i32, i32) {
    %c0_i32 = arith.constant 0 : i32
    %c0_i32_0 = arith.constant 0 : i32
    %c0_i32_1 = arith.constant 0 : i32
    return %c0_i32, %c0_i32_0 : i32, i32
  }
  func.func @transform_3(%arg0: i32) -> (i32, i32) {
    %c0_i32 = arith.constant 0 : i32
    %c0_i32_0 = arith.constant 0 : i32
    return %arg0, %c0_i32 : i32, i32
  }
}

</mosaic_0001>

<llo_original>
// kernel: tpu_custom_call.1
$region0: #{tpu_custom_call.1}
  #allocation0 [shape = 'u32[]', space=smem, size = 0x4, offset = 0x4, fixed_abs, tag = 'smem constant byte address 0x4 - core index']
  #allocation1 [shape = 'u32[144,128]{1,0:T(1,128)}', space=vmem, size = 0x12000, scoped, tag = 'internal scratch']
  %s0 = inlined_call_operand.vmem [shape: f32[100,128], index: 0, kind: input, shape index: {}]
  %s1 = inlined_call_operand.vmem [shape: f32[128,8], index: 1, kind: input, shape index: {}]
  %s2 = inlined_call_operand.vmem [shape: f32[8,128], index: 2, kind: input, shape index: {}]
  %s3 = inlined_call_operand.hbm [shape: f32[100,128], index: 3, kind: output, shape index: {}]
  %s4 = sld [smem:[#allocation0]]
  $region45: #{tpu_custom_call.1} parent=0
    _
  %s6 = ssub.s32 1, %s4
  %s7 = scalar_select 0, %s6, %s4
  $region1: #{tpu_custom_call.1} parent=0
    #allocation2 [shape = 'u8[16384]{0}', space=vmem, size = 0x4000, scoped, tag = 'output window, operand 0']
    #allocation3 [shape = 's32[2]{0}', space=sflag, size = 0x8, scoped, tag = 'scoped memory for tpu_custom_call.1']
    %8 = vsyncpa [#allocation3], 0
    %s9 = scalar_lea.sflag [#allocation3], 1
    %10 = vsyncpa %s9, 0
    loop: start=0, step=1, limit=9
    $region2: #{tpu_custom_call.1} parent=1 // loop_pre_header
      _
    $region3: #{tpu_custom_call.1} parent=1 // loop_header
      %s12 = sphi 0, %s16
      %p13 = scmp.ge.s32.totalorder %s12, 9
      %s22 = sphi 0, %s24
      %s25 = sphi 0, %s22
      %s26 = sphi 0, %s25
      %s42 = sphi 0, %s26
      %s46 = sphi 0, %s46
      %s48 = sphi 0, %s46
      %s49 = sphi 0, %s48
      %s63 = sphi 0, %s49
      %s67 = sphi 0, %s67
      %s69 = sphi 0, %s67
      %s70 = sphi 0, %s69
      %s84 = sphi 0, %s70
      %s90 = sphi 0, %s92
      %s93 = sphi 0, %s90
      %s94 = sphi 0, %s93
      %s110 = sphi 0, %s94
    $region4: #{tpu_custom_call.1} parent=1 // loop_header_branch
      %15 = sbr.rel (%p13) target = $region8
    $region5: #{tpu_custom_call.1} parent=1 // loop_body
      %s17 = ssub.s32 %s12, 1
      %s18 = ssub.s32 %s12, 2
      %s19 = sadd.s32 %s12, 1
      %s20 = ssub.s32 %s12, %s19
      %p21 = scmp.eq.s32.totalorder %s20, 0
      %s23 = sadd.s32 %s22, 1
      %s24 = scalar_select %p21, %s22, %s23
      %p27 = pneg %p21
      %p28 = scmp.eq.s32.totalorder %s12, 6
      %p29 = por %p27, %p28
      %p30 = scmp.ne.s32.totalorder %s22, %s25
      %p31 = scmp.eq.s32.totalorder %s12, 0
      %p32 = por %p30, %p31
      %p33 = scmp.ne.s32.totalorder %s22, %s25
      %p34 = scmp.eq.s32.totalorder %s17, 6
      %p35 = por %p33, %p34
      %p36 = scmp.ne.s32.totalorder %s25, %s26
      %p37 = scmp.eq.s32.totalorder %s17, 0
      %p38 = por %p36, %p37
      %p39 = scmp.ne.s32.totalorder %s25, %s26
      %p40 = scmp.eq.s32.totalorder %s18, 6
      %p41 = por %p39, %p40
      %p43 = scmp.ne.s32.totalorder %s26, %s42
      %p44 = scmp.eq.s32.totalorder %s18, 0
      %p45 = por %p43, %p44
      %s47 = sadd.s32 %s46, 1
      %p50 = scmp.eq.s32.totalorder %s12, 6
      %p51 = scmp.ne.s32.totalorder %s46, %s48
      %p52 = scmp.eq.s32.totalorder %s12, 0
      %p53 = por %p51, %p52
      %p54 = scmp.ne.s32.totalorder %s46, %s48
      %p55 = scmp.eq.s32.totalorder %s17, 6
      %p56 = por %p54, %p55
      %p57 = scmp.ne.s32.totalorder %s48, %s49
      %p58 = scmp.eq.s32.totalorder %s17, 0
      %p59 = por %p57, %p58
      %p60 = scmp.ne.s32.totalorder %s48, %s49
      %p61 = scmp.eq.s32.totalorder %s18, 6
      %p62 = por %p60, %p61
      %p64 = scmp.ne.s32.totalorder %s49, %s63
      %p65 = scmp.eq.s32.totalorder %s18, 0
      %p66 = por %p64, %p65
      %s68 = sadd.s32 %s67, 1
      %p71 = scmp.eq.s32.totalorder %s12, 6
      %p72 = scmp.ne.s32.totalorder %s67, %s69
      %p73 = scmp.eq.s32.totalorder %s12, 0
      %p74 = por %p72, %p73
      %p75 = scmp.ne.s32.totalorder %s67, %s69
      %p76 = scmp.eq.s32.totalorder %s17, 6
      %p77 = por %p75, %p76
      %p78 = scmp.ne.s32.totalorder %s69, %s70
      %p79 = scmp.eq.s32.totalorder %s17, 0
      %p80 = por %p78, %p79
      %p81 = scmp.ne.s32.totalorder %s69, %s70
      %p82 = scmp.eq.s32.totalorder %s18, 6
      %p83 = por %p81, %p82
      %p85 = scmp.ne.s32.totalorder %s70, %s84
      %p86 = scmp.eq.s32.totalorder %s18, 0
      %p87 = por %p85, %p86
      %s88 = ssub.s32 %s12, %s19
      %p89 = scmp.eq.s32.totalorder %s88, 0
      %s91 = sadd.s32 %s90, 1
      %s92 = scalar_select %p89, %s90, %s91
      %p95 = pneg %p89
      %p96 = scmp.eq.s32.totalorder %s12, 6
      %p97 = por %p95, %p96
      %p98 = scmp.ne.s32.totalorder %s90, %s93
      %p99 = scmp.eq.s32.totalorder %s12, 0
      %p100 = por %p98, %p99
      %p101 = scmp.ne.s32.totalorder %s90, %s93
      %p102 = scmp.eq.s32.totalorder %s17, 6
      %p103 = por %p101, %p102
      %p104 = scmp.ne.s32.totalorder %s93, %s94
      %p105 = scmp.eq.s32.totalorder %s17, 0
      %p106 = por %p104, %p105
      %p107 = scmp.ne.s32.totalorder %s93, %s94
      %p108 = scmp.eq.s32.totalorder %s18, 6
      %p109 = por %p107, %p108
      %p111 = scmp.ne.s32.totalorder %s94, %s110
      %p112 = scmp.eq.s32.totalorder %s18, 0
      %p113 = por %p111, %p112
      %p114 = scmp.le.s32.totalorder 1, %s12
      %p115 = scmp.lt.s32.totalorder %s12, 8
      %p116 = pnand %p114, %p115
      %p117 = pneg %p116
      // Predicated region
      $region9: #{tpu_custom_call.1} parent=5 // pred_check
        _
      $region10: #{tpu_custom_call.1} parent=5 // pred_check_branch
        %119 = sbr.rel (%p116) target = $region12
      $region11: #{tpu_custom_call.1} parent=5 // pred_region
        %s120 = ssub.s32 %s12, 1
        // Predicated region
        $region13: #{tpu_custom_call.1} parent=11 // pred_check
          %p121 = pneg %p59
        $region14: #{tpu_custom_call.1} parent=11 // pred_check_branch
          %123 = sbr.rel (%p121) target = $region16
        $region15: #{tpu_custom_call.1} parent=11 // pred_region
          _
        $region16: #{tpu_custom_call.1} parent=11 // pred_fallthru
          _
        // Predicated region
        $region17: #{tpu_custom_call.1} parent=11 // pred_check
          %p124 = pneg %p80
        $region18: #{tpu_custom_call.1} parent=11 // pred_check_branch
          %126 = sbr.rel (%p124) target = $region20
        $region19: #{tpu_custom_call.1} parent=11 // pred_region
          _
        $region20: #{tpu_custom_call.1} parent=11 // pred_fallthru
          _
      $region12: #{tpu_custom_call.1} parent=5 // pred_fallthru
        _
      %p127 = scmp.lt.s32.totalorder %s12, 7
      // Predicated region
      $region21: #{tpu_custom_call.1} parent=5 // pred_check
        %p128 = pneg %p127
      $region22: #{tpu_custom_call.1} parent=5 // pred_check_branch
        %130 = sbr.rel (%p128) target = $region24
      $region23: #{tpu_custom_call.1} parent=5 // pred_region
        // Predicated region
        $region25: #{tpu_custom_call.1} parent=23 // pred_check
          %p131 = pneg %p32
        $region26: #{tpu_custom_call.1} parent=23 // pred_check_branch
          %133 = sbr.rel (%p131) target = $region28
        $region27: #{tpu_custom_call.1} parent=23 // pred_region
          %s134 = smul.u32 2, %s12
          %s135 = ssub.s32 13, %s134
          %p136 = scmp.lt.s32.totalorder %s135, 2
          %s137 = scalar_select %p136, %s135, 2
          %s138 = smul.u32 128, %s137
          %p139 = scmp.lt.s32.totalorder %s134, 12
          %s140 = scalar_select %p139, %s134, 12
          %s141 = smul.addr %s140, 8
          %s142 = scalar_lea.vmem %s0, %s141
          %s143 = smul.u32 2, %s12
          %s144 = ssub.s32 13, %s143
          %p145 = scmp.lt.s32.totalorder %s144, 2
          %s146 = scalar_select %p145, %s144, 2
          %s147 = smul.u32 128, %s146
        $region28: #{tpu_custom_call.1} parent=23 // pred_fallthru
          _
      $region24: #{tpu_custom_call.1} parent=5 // pred_fallthru
        _
      %p148 = scmp.le.s32.totalorder 1, %s12
      %p149 = scmp.lt.s32.totalorder %s12, 8
      %p150 = pnand %p148, %p149
      %p151 = pneg %p150
      // Predicated region
      $region29: #{tpu_custom_call.1} parent=5 // pred_check
        _
      $region30: #{tpu_custom_call.1} parent=5 // pred_check_branch
        %153 = sbr.rel (%p150) target = $region32
      $region31: #{tpu_custom_call.1} parent=5 // pred_region
        %s154 = ssub.s32 %s12, 1
        %s155 = smul.u32 2, %s17
        %s156 = ssub.s32 13, %s155
        %p157 = scmp.lt.s32.totalorder %s156, 2
        %s158 = scalar_select %p157, %s156, 2
        %s159 = smul.u32 128, %s158
        %p160 = scmp.lt.s32.totalorder %s155, 12
        %s161 = scalar_select %p160, %s155, 12
        %s162 = smul.addr %s161, 8
        %s163 = scalar_lea.vmem %s0, %s162
        %p164 = pneg %p38
        %p165 = pneg %p35
        %p166 = pneg %p59
        %p167 = pneg %p56
        %p168 = pneg %p80
        %p169 = pneg %p77
        %p170 = pneg %p106
        %p171 = pneg %p103
        %s172 = sand.u32 %s93, 1
        %s173 = scalar_lea.sflag [#allocation3], %s172
        %s174 = sand.u32 %s93, 1
        %s175 = smul.addr %s174, 16
        %s176 = scalar_lea.vmem [#allocation2], %s175
        %s177 = smul.u32 2, %s17
        %s178 = ssub.s32 13, %s177
        %p179 = scmp.lt.s32.totalorder %s178, 2
        %s180 = scalar_select %p179, %s178, 2
        %s181 = smul.u32 128, %s180
        %p182 = scmp.lt.s32.totalorder %s177, 12
        %s183 = scalar_select %p182, %s177, 12
        %s184 = smul.addr %s183, 8
        %s185 = scalar_lea.vmem %s0, %s184
        %s186 = smul.u32 2, %s17
        %s187 = ssub.s32 13, %s186
        %p188 = scmp.lt.s32.totalorder %s187, 2
        %s189 = scalar_select %p188, %s187, 2
        %s190 = smul.u32 128, %s189
        %s191 = smul.u32 2, %s17
        %s192 = ssub.s32 13, %s191
        %p193 = scmp.lt.s32.totalorder %s192, 2
        %s194 = scalar_select %p193, %s192, 2
        %s195 = smul.u32 128, %s194
        %v196 = vld [vmem:[%s185] sm:$0xff]
        %v197 = vld [vmem:[%s185 + $0x8] sm:$0xff]
        %v198 = vld [vmem:[%s1] sm:$0xff]
        %v199 = vld [vmem:[%s1 + $0x8] sm:$0xff]
        %v200 = vld [vmem:[%s1 + $0x10] sm:$0xff]
        %v201 = vld [vmem:[%s1 + $0x18] sm:$0xff]
        %v202 = vld [vmem:[%s1 + $0x20] sm:$0xff]
        %v203 = vld [vmem:[%s1 + $0x28] sm:$0xff]
        %v204 = vld [vmem:[%s1 + $0x30] sm:$0xff]
        %v205 = vld [vmem:[%s1 + $0x38] sm:$0xff]
        %v206 = vld [vmem:[%s1 + $0x40] sm:$0xff]
        %v207 = vld [vmem:[%s1 + $0x48] sm:$0xff]
        %v208 = vld [vmem:[%s1 + $0x50] sm:$0xff]
        %v209 = vld [vmem:[%s1 + $0x58] sm:$0xff]
        %v210 = vld [vmem:[%s1 + $0x60] sm:$0xff]
        %v211 = vld [vmem:[%s1 + $0x68] sm:$0xff]
        %v212 = vld [vmem:[%s1 + $0x70] sm:$0xff]
        %v213 = vld [vmem:[%s1 + $0x78] sm:$0xff]
        %214 = vmatprep.subr.mxu0 0.0
        %215 = vmatpush1.msra.mxu0 %v213
        %216 = vmatprep.subr.mxu0 0.0
        %217 = vmatpush1.msra.mxu0 %v212
        %218 = vmatprep.subr.mxu0 0.0
        %219 = vmatpush1.msra.mxu0 %v211
        %220 = vmatprep.subr.mxu0 0.0
        %221 = vmatpush1.msra.mxu0 %v210
        %222 = vmatprep.subr.mxu0 0.0
        %223 = vmatpush1.msra.mxu0 %v209
        %224 = vmatprep.subr.mxu0 0.0
        %225 = vmatpush1.msra.mxu0 %v208
        %226 = vmatprep.subr.mxu0 0.0
        %227 = vmatpush1.msra.mxu0 %v207
        %228 = vmatprep.subr.mxu0 0.0
        %229 = vmatpush1.msra.mxu0 %v206
        %230 = vmatprep.subr.mxu0 0.0
        %231 = vmatpush1.msra.mxu0 %v205
        %232 = vmatprep.subr.mxu0 0.0
        %233 = vmatpush1.msra.mxu0 %v204
        %234 = vmatprep.subr.mxu0 0.0
        %235 = vmatpush1.msra.mxu0 %v203
        %236 = vmatprep.subr.mxu0 0.0
        %237 = vmatpush1.msra.mxu0 %v202
        %238 = vmatprep.subr.mxu0 0.0
        %239 = vmatpush1.msra.mxu0 %v201
        %240 = vmatprep.subr.mxu0 0.0
        %241 = vmatpush1.msra.mxu0 %v200
        %242 = vmatprep.subr.mxu0 0.0
        %243 = vmatpush1.msra.mxu0 %v199
        %244 = vmatprep.subr.mxu0 0.0
        %245 = vmatpush1.msra.mxu0 %v198
        %246 = vmatprep.subr.mxu0 0.0
        %247 = vmatpush2.msra.mxu0 0.0
        %248 = vmatprep.subr.mxu0 0.0
        %249 = vmatpush2.msra.mxu0 0.0
        %250 = vmatprep.subr.mxu0 0.0
        %251 = vmatpush2.msra.mxu0 0.0
        %252 = vmatprep.subr.mxu0 0.0
        %253 = vmatpush2.msra.mxu0 0.0
        %254 = vmatprep.subr.mxu0 0.0
        %255 = vmatpush2.msra.mxu0 0.0
        %256 = vmatprep.subr.mxu0 0.0
        %257 = vmatpush2.msra.mxu0 0.0
        %258 = vmatprep.subr.mxu0 0.0
        %259 = vmatpush2.msra.mxu0 0.0
        %260 = vmatprep.subr.mxu0 0.0
        %261 = vmatpush2.msra.mxu0 0.0
        %262 = vmatprep.subr.mxu0 0.0
        %263 = vmatpush2.msra.mxu0 0.0
        %264 = vmatprep.subr.mxu0 0.0
        %265 = vmatpush2.msra.mxu0 0.0
        %266 = vmatprep.subr.mxu0 0.0
        %267 = vmatpush2.msra.mxu0 0.0
        %268 = vmatprep.subr.mxu0 0.0
        %269 = vmatpush2.msra.mxu0 0.0
        %270 = vmatprep.subr.mxu0 0.0
        %271 = vmatpush2.msra.mxu0 0.0
        %272 = vmatprep.subr.mxu0 0.0
        %273 = vmatpush2.msra.mxu0 0.0
        %274 = vmatprep.subr.mxu0 0.0
        %275 = vmatpush2.msra.mxu0 0.0
        %276 = vmatprep.subr.mxu0 0.0
        %277 = vmatpush2.msra.mxu0 0.0
        %278 = vmatprep.mubr.f32.mxu0 0.0
        %279 = vmatmul.mubr.f32.gmra.mxu0 %v196
        %v280 = vpop.f32.mrf.mxu0
        %v281 = vadd.f32 0.0, %v280
        %v282 = vpop.f32.mrf.mxu0
        %283 = vmatprep.mubr.f32.mxu0 0.0
        %284 = vmatmul.mubr.f32.gmra.mxu0 %v197
        %v285 = vpop.f32.mrf.mxu0
        %v286 = vadd.f32 0.0, %v285
        %v287 = vpop.f32.mrf.mxu0
        %288 = vdwg.mxu0
        %v289 = vmax.f32 %v281, 0.0
        %v290 = vmax.f32 %v286, 0.0
        %v291 = vld [vmem:[%s2] sm:$0xff]
        %vm292 = vcmask 64512
        %v294 = vsel %vm292, %v289, 0
        %v297 = vsel %vm292, %v290, 0
        %299 = vmatprep.subr.mxu0 0.0
        %300 = vmatpush1.msra.mxu0 0.0
        %301 = vmatprep.subr.mxu0 0.0
        %302 = vmatpush1.msra.mxu0 0.0
        %303 = vmatprep.subr.mxu0 0.0
        %304 = vmatpush1.msra.mxu0 0.0
        %305 = vmatprep.subr.mxu0 0.0
        %306 = vmatpush1.msra.mxu0 0.0
        %307 = vmatprep.subr.mxu0 0.0
        %308 = vmatpush1.msra.mxu0 0.0
        %309 = vmatprep.subr.mxu0 0.0
        %310 = vmatpush1.msra.mxu0 0.0
        %311 = vmatprep.subr.mxu0 0.0
        %312 = vmatpush1.msra.mxu0 0.0
        %313 = vmatprep.subr.mxu0 0.0
        %314 = vmatpush1.msra.mxu0 0.0
        %315 = vmatprep.subr.mxu0 0.0
        %316 = vmatpush1.msra.mxu0 0.0
        %317 = vmatprep.subr.mxu0 0.0
        %318 = vmatpush1.msra.mxu0 0.0
        %319 = vmatprep.subr.mxu0 0.0
        %320 = vmatpush1.msra.mxu0 0.0
        %321 = vmatprep.subr.mxu0 0.0
        %322 = vmatpush1.msra.mxu0 0.0
        %323 = vmatprep.subr.mxu0 0.0
        %324 = vmatpush1.msra.mxu0 0.0
        %325 = vmatprep.subr.mxu0 0.0
        %326 = vmatpush1.msra.mxu0 0.0
        %327 = vmatprep.subr.mxu0 0.0
        %328 = vmatpush1.msra.mxu0 0.0
        %329 = vmatprep.subr.mxu0 0.0
        %330 = vmatpush1.msra.mxu0 %v291
        %331 = vmatprep.subr.mxu0 0.0
        %332 = vmatpush2.msra.mxu0 0.0
        %333 = vmatprep.subr.mxu0 0.0
        %334 = vmatpush2.msra.mxu0 0.0
        %335 = vmatprep.subr.mxu0 0.0
        %336 = vmatpush2.msra.mxu0 0.0
        %337 = vmatprep.subr.mxu0 0.0
        %338 = vmatpush2.msra.mxu0 0.0
        %339 = vmatprep.subr.mxu0 0.0
        %340 = vmatpush2.msra.mxu0 0.0
        %341 = vmatprep.subr.mxu0 0.0
        %342 = vmatpush2.msra.mxu0 0.0
        %343 = vmatprep.subr.mxu0 0.0
        %344 = vmatpush2.msra.mxu0 0.0
        %345 = vmatprep.subr.mxu0 0.0
        %346 = vmatpush2.msra.mxu0 0.0
        %347 = vmatprep.subr.mxu0 0.0
        %348 = vmatpush2.msra.mxu0 0.0
        %349 = vmatprep.subr.mxu0 0.0
        %350 = vmatpush2.msra.mxu0 0.0
        %351 = vmatprep.subr.mxu0 0.0
        %352 = vmatpush2.msra.mxu0 0.0
        %353 = vmatprep.subr.mxu0 0.0
        %354 = vmatpush2.msra.mxu0 0.0
        %355 = vmatprep.subr.mxu0 0.0
        %356 = vmatpush2.msra.mxu0 0.0
        %357 = vmatprep.subr.mxu0 0.0
        %358 = vmatpush2.msra.mxu0 0.0
        %359 = vmatprep.subr.mxu0 0.0
        %360 = vmatpush2.msra.mxu0 0.0
        %361 = vmatprep.subr.mxu0 0.0
        %362 = vmatpush2.msra.mxu0 0.0
        %363 = vmatprep.mubr.f32.mxu0 0.0
        %364 = vmatmul.mubr.f32.gmra.mxu0 %v294
        %v365 = vpop.f32.mrf.mxu0
        %v366 = vadd.f32 0.0, %v365
        %v367 = vpop.f32.mrf.mxu0
        %368 = vmatprep.mubr.f32.mxu0 0.0
        %369 = vmatmul.mubr.f32.gmra.mxu0 %v297
        %v370 = vpop.f32.mrf.mxu0
        %v371 = vadd.f32 0.0, %v370
        %v372 = vpop.f32.mrf.mxu0
        %373 = vdwg.mxu0
        %v374 = vsub.f32 0.0, %v366
        %v375 = vsub.f32 0.0, %v371
        %v376 = vmul.f32 %v374, 1.442695
        %v377 = vpow.pop %v376
        %v378 = vmul.f32 %v375, 1.442695
        %v379 = vpow.pop %v378
        %v380 = vadd.f32 %v377, 1.0
        %v381 = vadd.f32 %v379, 1.0
        %v382 = vrcp.pop %v380
        %v383 = vmul.f32 1.0, %v382
        %v384 = vrcp.pop %v381
        %v385 = vmul.f32 1.0, %v384
        %v386 = vmul.f32 %v383, %v196
        %v387 = vmul.f32 %v385, %v197
        %388 = vst [vmem:[%s176] sm:$0xff] %v386
        %389 = vst [vmem:[%s176 + $0x8] sm:$0xff] %v387
        %s390 = sand.u32 %s93, 1
        %s391 = scalar_lea.sflag [#allocation3], %s390
        %s392 = sand.u32 %s93, 1
        %s393 = smul.addr %s392, 16
        %s394 = scalar_lea.vmem [#allocation2], %s393
        // Predicated region
        $region33: #{tpu_custom_call.1} parent=31 // pred_check
          %p395 = pneg %p103
        $region34: #{tpu_custom_call.1} parent=31 // pred_check_branch
          %397 = sbr.rel (%p395) target = $region36
        $region35: #{tpu_custom_call.1} parent=31 // pred_region
          %s398 = smul.u32 2, %s17
          %s399 = ssub.s32 13, %s398
          %p400 = scmp.lt.s32.totalorder %s399, 2
          %s401 = scalar_select %p400, %s399, 2
          %s402 = smul.u32 128, %s401
          %s404 = ssub.s32 256, %s402
          %405 = vsyncadd %s391, %s404
          %p406 = scmp.ne.s32.totalorder 0, %s402
          %s407 = smul.addr %s398, 128
          %s408 = scalar_lea.hbm %s3, %s407
          %s409 = smul.u32 8, %s401
          %s410 = sshll.u32 %s394, 4
          %s411 = int_to_ptr.vmem [resolvable:$true] %s410
          %s412 = sshll.u32 %s409, 4
          %416 = dma.vmem_to_hbm [thread:$0]  (%p406), %s411, %s412, %s408, %s391, 128, 128, 8
        $region36: #{tpu_custom_call.1} parent=31 // pred_fallthru
          _
      $region32: #{tpu_custom_call.1} parent=5 // pred_fallthru
        _
      %p417 = scmp.le.s32.totalorder 2, %s12
      // Predicated region
      $region37: #{tpu_custom_call.1} parent=5 // pred_check
        %p418 = pneg %p417
      $region38: #{tpu_custom_call.1} parent=5 // pred_check_branch
        %420 = sbr.rel (%p418) target = $region40
      $region39: #{tpu_custom_call.1} parent=5 // pred_region
        %s421 = ssub.s32 %s12, 2
        // Predicated region
        $region41: #{tpu_custom_call.1} parent=39 // pred_check
          %p422 = pneg %p109
        $region42: #{tpu_custom_call.1} parent=39 // pred_check_branch
          %424 = sbr.rel (%p422) target = $region44
        $region43: #{tpu_custom_call.1} parent=39 // pred_region
          %s425 = sand.u32 %s94, 1
          %s426 = scalar_lea.sflag [#allocation3], %s425
          %s427 = sand.u32 %s94, 1
          %s428 = smul.addr %s427, 16
          %s429 = scalar_lea.vmem [#allocation2], %s428
          %430 = dma.done %s426, 256
        $region44: #{tpu_custom_call.1} parent=39 // pred_fallthru
          _
      $region40: #{tpu_custom_call.1} parent=5 // pred_fallthru
        _
    $region6: #{tpu_custom_call.1} parent=1 // loop_footer
      %s16 = sadd.s32 1, %s12
    $region7: #{tpu_custom_call.1} parent=1 // loop_footer_branch
      %11 = sbr.rel target = $region3
    $region8: #{tpu_custom_call.1} parent=1 // loop_exit
      _
    %431 = vsyncpa [#allocation3], 1
    %s432 = scalar_lea.sflag [#allocation3], 1
    %433 = vsyncpa %s432, 1

</llo_original>
